<compile_context>
chip_gen: v7x
topology: tpu7x:2x2x1
jax: 0.10.0
libtpu: 0.0.40
codegen_flags: <defaults>
</compile_context>

<pallas_src>
import functools

import jax
import jax.numpy as jnp
from jax import lax
from jax.experimental import pallas as pl
from jax.experimental.pallas import tpu as pltpu


# ------------------------------------------------------------------ utilities
def _softplus(z):
    # matches torch.nn.functional.softplus (beta=1, threshold=20)
    return jnp.where(z > 20.0, z, jnp.log1p(jnp.exp(jnp.minimum(z, 20.0))))


def _pick_token_tile(n, requested=None):
    if requested is not None and n % requested == 0:
        return requested
    for tn in (512, 256, 128, 64, 32, 16, 8):
        if tn <= n and n % tn == 0:
            return tn
    return n


# --------------------------------------------------------------- router kernel
def router_kernel(x_ref, w_ref, b_ref, u_ref, gate_ref, *, num_experts, top_k):
    x = x_ref[...]                                                      # (TN, H) f32
    # fused router matmul: [logits | noise_logits] in a single MXU pass
    both = jnp.dot(x, w_ref[...], preferred_element_type=jnp.float32) + b_ref[...]
    logits = both[:, :num_experts]
    noise_logits = both[:, num_experts:]
    noisy = logits + u_ref[...] * _softplus(noise_logits)               # (TN, E)

    TN, E = noisy.shape
    col = lax.broadcasted_iota(jnp.int32, (TN, E), 1)
    selected = jnp.zeros((TN, E), dtype=jnp.bool_)
    neg_inf = jnp.float32(-jnp.inf)

    # iterative top-k (top_k is a static Python int, fully unrolled); ties are
    # broken toward the lowest column index (torch.topk may differ on exact ties)
    for _ in range(top_k):
        masked = jnp.where(selected, neg_inf, noisy)
        cur_max = jnp.max(masked, axis=-1, keepdims=True)
        is_max = masked == cur_max
        first = jnp.min(jnp.where(is_max, col, E), axis=-1, keepdims=True)
        selected = jnp.logical_or(selected, col == first)

    # softmax over the sparse (top-k) logits; non-selected get exactly 0
    m = jnp.max(jnp.where(selected, noisy, neg_inf), axis=-1, keepdims=True)
    p = jnp.where(selected, jnp.exp(noisy - m), 0.0)
    gate_ref[...] = p / jnp.sum(p, axis=-1, keepdims=True)


# --------------------------------------------------------------- expert kernel
def expert_kernel(x_ref, gate_ref, w1_ref, b1_ref, w2_ref, b2_ref, out_ref, acc_ref):
    e = pl.program_id(1)

    @pl.when(e == 0)
    def _():
        acc_ref[...] = jnp.zeros_like(acc_ref)

    x = x_ref[...].astype(jnp.bfloat16)                                  # (TN, H)
    # nn.Linear weights kept in (out, in) layout -> contract the `in` axis.
    h = lax.dot_general(x, w1_ref[0], (((1,), (1,)), ((), ())),
                        preferred_element_type=jnp.float32)              # (TN, 4H)
    h = jnp.maximum(h + b1_ref[0], 0.0)                                  # f32 bias/ReLU
    y = lax.dot_general(h.astype(jnp.bfloat16), w2_ref[0], (((1,), (1,)), ((), ())),
                        preferred_element_type=jnp.float32)              # (TN, H)
    y = y + b2_ref[0]

    acc_ref[...] += gate_ref[0] * y                                      # gate_ref[0]: (TN, 1)

    @pl.when(e == pl.num_programs(1) - 1)
    def _():
        out_ref[...] = acc_ref[...].astype(out_ref.dtype)


# -------------------------------------------------------------------- wrapper
def sparse_moe_forward(x, params, noise_u, *, top_k, token_tile=None):
    """x: (B, T, H) float32. Returns (B, T, H) float32."""
    B, T, H = x.shape
    N = B * T
    E = params["wr"].shape[0]
    H4 = 4 * H
    TN = _pick_token_tile(N, token_tile)
    n_tiles = N // TN

    flat_x = x.reshape(N, H)
    u = noise_u.reshape(N, E)

    # ---- router (token-tiled, fused logits/noise matmul, f32 for exact top-k)
    w_cat = jnp.concatenate([params["wr"].T, params["wn"].T], axis=1)    # (H, 2E)
    b_cat = jnp.concatenate([params["br"], params["bn"]]).reshape(1, 2 * E)

    router_cost = pl.CostEstimate(
        flops=2 * N * H * 2 * E,
        transcendentals=2 * N * E,
        bytes_accessed=4 * (N * H + H * 2 * E + 2 * E + 2 * N * E),
    )
    gate = pl.pallas_call(
        functools.partial(router_kernel, num_experts=E, top_k=top_k),
        out_shape=jax.ShapeDtypeStruct((N, E), jnp.float32),
        grid=(n_tiles,),
        in_specs=[
            pl.BlockSpec((TN, H), lambda t: (t, 0)),        # x tile
            pl.BlockSpec((H, 2 * E), lambda t: (0, 0)),     # fused router weights
            pl.BlockSpec((1, 2 * E), lambda t: (0, 0)),     # fused router biases
            pl.BlockSpec((TN, E), lambda t: (t, 0)),        # uniform noise
        ],
        out_specs=pl.BlockSpec((TN, E), lambda t: (t, 0)),
        compiler_params=pltpu.CompilerParams(dimension_semantics=("parallel",)),
        cost_estimate=router_cost,
    )(flat_x, w_cat, b_cat, u)

    # gate pre-shaped (E, N, 1): the expert kernel's BlockSpec slices its own
    # expert row for free (no per-step iota/where/reduce).
    gate3 = jnp.transpose(gate, (1, 0))[:, :, None]                      # (E, N, 1)

    # bf16 expert weights: MXU-native rate and half the weight DMA bytes.
    # TODO(synk): in production store/cast these once at init, not per call.
    w1 = params["w1"].astype(jnp.bfloat16)        # (E, 4H, H)  nn.Linear layout
    w2 = params["w2"].astype(jnp.bfloat16)        # (E, H, 4H)
    b1 = params["b1"].reshape(E, 1, H4)           # f32
    b2 = params["b2"].reshape(E, 1, H)            # f32

    expert_cost = pl.CostEstimate(
        flops=4 * N * H * H4 * E,
        transcendentals=0,
        bytes_accessed=(4 * N * H                 # x (f32 in)
                        + 2 * E * 2 * H * H4      # bf16 weights
                        + 4 * E * (H4 + H)        # biases
                        + 4 * E * N               # gate
                        + 4 * N * H),             # out
    )

    out = pl.pallas_call(
        expert_kernel,
        out_shape=jax.ShapeDtypeStruct((N, H), jnp.float32),
        grid=(n_tiles, E),                        # expert axis = reduction, last
        in_specs=[
            pl.BlockSpec((TN, H), lambda t, e: (t, 0)),        # x tile
            pl.BlockSpec((1, TN, 1), lambda t, e: (e, t, 0)),  # gate column slice
            pl.BlockSpec((1, H4, H), lambda t, e: (e, 0, 0)),  # W1_e (out, in)
            pl.BlockSpec((1, 1, H4), lambda t, e: (e, 0, 0)),  # b1_e
            pl.BlockSpec((1, H, H4), lambda t, e: (e, 0, 0)),  # W2_e (out, in)
            pl.BlockSpec((1, 1, H), lambda t, e: (e, 0, 0)),   # b2_e
        ],
        out_specs=pl.BlockSpec((TN, H), lambda t, e: (t, 0)),
        scratch_shapes=[pltpu.VMEM((TN, H), jnp.float32)],     # f32 accumulator
        compiler_params=pltpu.CompilerParams(
            dimension_semantics=("parallel", "arbitrary"),
            vmem_limit_bytes=32 * 1024 * 1024,
        ),
        cost_estimate=expert_cost,
    )(flat_x, gate3, w1, b1, w2, b2)

    return out.reshape(B, T, H)


# ------------------------------------------------------------ pure-JAX reference
def sparse_moe_reference(x, params, noise_u, *, top_k):
    B, T, H = x.shape
    N = B * T
    E = params["wr"].shape[0]
    fx = x.reshape(N, H)
    u = noise_u.reshape(N, E)

    logits = fx @ params["wr"].T + params["br"]
    noise_logits = fx @ params["wn"].T + params["bn"]
    noisy = logits + u * jax.nn.softplus(noise_logits)
    _, idx = lax.top_k(noisy, top_k)                                     # (N, top_k)
    mask = jnp.any(jax.nn.one_hot(idx, E, dtype=jnp.bool_), axis=1)      # (N, E)
    sparse = jnp.where(mask, noisy, -jnp.inf)
    gate = jax.nn.softmax(sparse, axis=-1)

    out = jnp.zeros((N, H), jnp.float32)
    for e in range(E):
        h = jnp.maximum(fx @ params["w1"][e].T + params["b1"][e], 0.0)
        y = h @ params["w2"][e].T + params["b2"][e]
        out = out + gate[:, e:e + 1] * y
    return out.reshape(B, T, H)


# ----------------------------------------------------------------------- main
if __name__ == "__main__":
    B, T, H = 2, 8, 32          # n_embed = 32
    E, TOP_K = 8, 2             # num_experts = 8
    H4 = 4 * H

    key = jax.random.PRNGKey(0)
    ks = jax.random.split(key, 10)

    x = jax.random.normal(ks[0], (B, T, H), jnp.float32)
    noise_u = jax.random.uniform(ks[1], (B, T, E), jnp.float32)          # torch.rand_like

    params = {
        # router: Linear(H -> E) x2
        "wr": jax.random.normal(ks[2], (E, H), jnp.float32) * 0.1,
        "br": jax.random.normal(ks[3], (E,), jnp.float32) * 0.1,
        "wn": jax.random.normal(ks[4], (E, H), jnp.float32) * 0.1,
        "bn": jax.random.normal(ks[5], (E,), jnp.float32) * 0.1,
        # experts: Linear(H -> 4H), Linear(4H -> H), stacked over E (PyTorch layout)
        "w1": jax.random.normal(ks[6], (E, H4, H), jnp.float32) * 0.1,
        "b1": jax.random.normal(ks[7], (E, H4), jnp.float32) * 0.1,
        "w2": jax.random.normal(ks[8], (E, H, H4), jnp.float32) * 0.1,
        "b2": jax.random.normal(ks[9], (E, H), jnp.float32) * 0.1,
    }

    # token_tile=8 -> 2 token tiles of 8 rows: exercises the token grid axis,
    # the per-tile accumulator reset, and the gate BlockSpec slicing.
    out = sparse_moe_forward(x, params, noise_u, top_k=TOP_K, token_tile=8)
    out = jax.block_until_ready(out)

    ref = sparse_moe_reference(x, params, noise_u, top_k=TOP_K)
    assert out.shape == (B, T, H)
    # expert matmuls run in bf16 on the MXU (f32 accumulation); tolerance
    # reflects bf16 operand rounding. The router/top-k path is exact f32.
    assert jnp.allclose(out, ref, rtol=2e-2, atol=2e-2), "mismatch vs reference"

    print("KERNEL_OK")
</pallas_src>

<mosaic_0001>
module attributes {stable_mosaic.version = 11 : i64} {
  func.func @router_kernel(%arg0: i32, %arg1: memref<8x32xf32, #tpu.memory_space<vmem>>, %arg2: memref<32x16xf32, #tpu.memory_space<vmem>>, %arg3: memref<1x16xf32, #tpu.memory_space<vmem>>, %arg4: memref<8x8xf32, #tpu.memory_space<vmem>>, %arg5: memref<8x8xf32, #tpu.memory_space<vmem>>) attributes {dimension_semantics = [#tpu.dimension_semantics<parallel>], iteration_bounds = array<i64: 2>, scalar_prefetch = 0 : i64, scratch_operands = 0 : i64, tpu.core_type = #tpu.core_type<tc>, window_params = [{transform_indices = @transform_0, window_bounds = array<i64: 8, 32>}, {pipeline_mode = #tpu.pipeline_mode<synchronous>, transform_indices = @transform_1, window_bounds = array<i64: 32, 16>}, {pipeline_mode = #tpu.pipeline_mode<synchronous>, transform_indices = @transform_2, window_bounds = array<i64: 1, 16>}, {transform_indices = @transform_3, window_bounds = array<i64: 8, 8>}, {transform_indices = @transform_4, window_bounds = array<i64: 8, 8>}]} {
    %c0 = arith.constant 0 : index
    %c0_0 = arith.constant 0 : index
    %0 = vector.load %arg1[%c0, %c0_0] : memref<8x32xf32, #tpu.memory_space<vmem>>, vector<8x32xf32>
    %c0_1 = arith.constant 0 : index
    %c0_2 = arith.constant 0 : index
    %1 = vector.load %arg2[%c0_1, %c0_2] : memref<32x16xf32, #tpu.memory_space<vmem>>, vector<32x16xf32>
    %cst = arith.constant dense<0.000000e+00> : vector<8x16xf32>
    %2 = tpu.matmul %0, %1, %cst {dimension_numbers = #tpu.dot_dimension_numbers<[1], [0], [0], [1], [0, 0, 1, 1], [], []>} : vector<8x32xf32>, vector<32x16xf32>, vector<8x16xf32> -> vector<8x16xf32>
    %c0_3 = arith.constant 0 : index
    %c0_4 = arith.constant 0 : index
    %3 = vector.load %arg3[%c0_3, %c0_4] : memref<1x16xf32, #tpu.memory_space<vmem>>, vector<1x16xf32>
    %4 = vector.broadcast %3 : vector<1x16xf32> to vector<8x16xf32>
    %5 = arith.addf %2, %4 : vector<8x16xf32>
    %6 = vector.extract_strided_slice %5 {offsets = [0, 0], sizes = [8, 8], strides = [1, 1]} : vector<8x16xf32> to vector<8x8xf32>
    %7 = vector.extract_strided_slice %5 {offsets = [0, 8], sizes = [8, 8], strides = [1, 1]} : vector<8x16xf32> to vector<8x8xf32>
    %c0_5 = arith.constant 0 : index
    %c0_6 = arith.constant 0 : index
    %8 = vector.load %arg4[%c0_5, %c0_6] : memref<8x8xf32, #tpu.memory_space<vmem>>, vector<8x8xf32>
    %cst_7 = arith.constant 2.000000e+01 : f32
    %9 = vector.broadcast %cst_7 : f32 to vector<8x8xf32>
    %10 = arith.cmpf ogt, %7, %9 : vector<8x8xf32>
    %cst_8 = arith.constant 2.000000e+01 : f32
    %11 = vector.broadcast %cst_8 : f32 to vector<8x8xf32>
    %12 = arith.minimumf %7, %11 : vector<8x8xf32>
    %13 = math.exp %12 : vector<8x8xf32>
    %14 = math.log1p %13 : vector<8x8xf32>
    %15 = arith.select %10, %7, %14 : vector<8x8xi1>, vector<8x8xf32>
    %16 = arith.mulf %8, %15 : vector<8x8xf32>
    %17 = arith.addf %6, %16 : vector<8x8xf32>
    %18 = tpu.iota {dimensions = array<i32: 1>} : vector<8x8xi32>
    %false = arith.constant false
    %19 = vector.broadcast %false : i1 to vector<8x8xi1>
    %cst_9 = arith.constant 0xFF800000 : f32
    %20 = vector.broadcast %cst_9 : f32 to vector<8x8xf32>
    %21 = arith.select %19, %20, %17 : vector<8x8xi1>, vector<8x8xf32>
    %cst_10 = arith.constant dense<0xFF800000> : vector<8xf32>
    %22 = vector.multi_reduction <maximumf>, %21, %cst_10 [1] : vector<8x8xf32> to vector<8xf32>
    %23 = vector.shape_cast %22 : vector<8xf32> to vector<8x1xf32>
    %24 = vector.broadcast %23 : vector<8x1xf32> to vector<8x8xf32>
    %25 = arith.cmpf oeq, %21, %24 : vector<8x8xf32>
    %c8_i32 = arith.constant 8 : i32
    %26 = vector.broadcast %c8_i32 : i32 to vector<8x8xi32>
    %27 = arith.select %25, %18, %26 : vector<8x8xi1>, vector<8x8xi32>
    %cst_11 = arith.constant dense<2147483647> : vector<8xi32>
    %28 = vector.multi_reduction <minsi>, %27, %cst_11 [1] : vector<8x8xi32> to vector<8xi32>
    %29 = vector.shape_cast %28 : vector<8xi32> to vector<8x1xi32>
    %30 = vector.broadcast %29 : vector<8x1xi32> to vector<8x8xi32>
    %31 = arith.cmpi eq, %18, %30 : vector<8x8xi32>
    %32 = arith.ori %19, %31 : vector<8x8xi1>
    %cst_12 = arith.constant 0xFF800000 : f32
    %33 = vector.broadcast %cst_12 : f32 to vector<8x8xf32>
    %34 = arith.select %32, %33, %17 : vector<8x8xi1>, vector<8x8xf32>
    %cst_13 = arith.constant dense<0xFF800000> : vector<8xf32>
    %35 = vector.multi_reduction <maximumf>, %34, %cst_13 [1] : vector<8x8xf32> to vector<8xf32>
    %36 = vector.shape_cast %35 : vector<8xf32> to vector<8x1xf32>
    %37 = vector.broadcast %36 : vector<8x1xf32> to vector<8x8xf32>
    %38 = arith.cmpf oeq, %34, %37 : vector<8x8xf32>
    %c8_i32_14 = arith.constant 8 : i32
    %39 = vector.broadcast %c8_i32_14 : i32 to vector<8x8xi32>
    %40 = arith.select %38, %18, %39 : vector<8x8xi1>, vector<8x8xi32>
    %cst_15 = arith.constant dense<2147483647> : vector<8xi32>
    %41 = vector.multi_reduction <minsi>, %40, %cst_15 [1] : vector<8x8xi32> to vector<8xi32>
    %42 = vector.shape_cast %41 : vector<8xi32> to vector<8x1xi32>
    %43 = vector.broadcast %42 : vector<8x1xi32> to vector<8x8xi32>
    %44 = arith.cmpi eq, %18, %43 : vector<8x8xi32>
    %45 = arith.ori %32, %44 : vector<8x8xi1>
    %cst_16 = arith.constant 0xFF800000 : f32
    %46 = vector.broadcast %cst_16 : f32 to vector<8x8xf32>
    %47 = arith.select %45, %17, %46 : vector<8x8xi1>, vector<8x8xf32>
    %cst_17 = arith.constant dense<0xFF800000> : vector<8xf32>
    %48 = vector.multi_reduction <maximumf>, %47, %cst_17 [1] : vector<8x8xf32> to vector<8xf32>
    %49 = vector.shape_cast %48 : vector<8xf32> to vector<8x1xf32>
    %50 = vector.broadcast %49 : vector<8x1xf32> to vector<8x8xf32>
    %51 = arith.subf %17, %50 : vector<8x8xf32>
    %52 = math.exp %51 : vector<8x8xf32>
    %cst_18 = arith.constant 0.000000e+00 : f32
    %53 = vector.broadcast %cst_18 : f32 to vector<8x8xf32>
    %54 = arith.select %45, %52, %53 : vector<8x8xi1>, vector<8x8xf32>
    %cst_19 = arith.constant dense<0.000000e+00> : vector<8xf32>
    %55 = vector.multi_reduction <add>, %54, %cst_19 [1] : vector<8x8xf32> to vector<8xf32>
    %56 = vector.shape_cast %55 : vector<8xf32> to vector<8x1xf32>
    %57 = vector.broadcast %56 : vector<8x1xf32> to vector<8x8xf32>
    %58 = arith.divf %54, %57 : vector<8x8xf32>
    %c0_20 = arith.constant 0 : index
    %c0_21 = arith.constant 0 : index
    %59 = vector.load %arg5[%c0_20, %c0_21] : memref<8x8xf32, #tpu.memory_space<vmem>>, vector<8x8xf32>
    tpu.vector_store %arg5[%c0_20, %c0_21], %58 {strides = array<i32>} : memref<8x8xf32, #tpu.memory_space<vmem>>, vector<8x8xf32>,
    return
  }
  func.func @transform_0(%arg0: i32) -> (i32, i32) {
    %c0_i32 = arith.constant 0 : i32
    %c0_i32_0 = arith.constant 0 : i32
    return %arg0, %c0_i32 : i32, i32
  }
  func.func @transform_1(%arg0: i32) -> (i32, i32) {
    %c0_i32 = arith.constant 0 : i32
    %c0_i32_0 = arith.constant 0 : i32
    %c0_i32_1 = arith.constant 0 : i32
    return %c0_i32, %c0_i32_0 : i32, i32
  }
  func.func @transform_2(%arg0: i32) -> (i32, i32) {
    %c0_i32 = arith.constant 0 : i32
    %c0_i32_0 = arith.constant 0 : i32
    %c0_i32_1 = arith.constant 0 : i32
    return %c0_i32, %c0_i32_0 : i32, i32
  }
  func.func @transform_3(%arg0: i32) -> (i32, i32) {
    %c0_i32 = arith.constant 0 : i32
    %c0_i32_0 = arith.constant 0 : i32
    return %arg0, %c0_i32 : i32, i32
  }
  func.func @transform_4(%arg0: i32) -> (i32, i32) {
    %c0_i32 = arith.constant 0 : i32
    %c0_i32_0 = arith.constant 0 : i32
    return %arg0, %c0_i32 : i32, i32
  }
}

</mosaic_0001>

<llo_original>
// kernel: tpu_custom_call.1
$region0: #{tpu_custom_call.1}
  #allocation0 [shape = 'u32[]', space=smem, size = 0x4, offset = 0x4, fixed_abs, tag = 'smem constant byte address 0x4 - core index']
  #allocation1 [shape = 'u32[144,128]{1,0:T(1,128)}', space=vmem, size = 0x12000, scoped, tag = 'internal scratch']
  %s0 = inlined_call_operand.vmem [shape: f32[16,32], index: 0, kind: input, shape index: {}]
  %s1 = inlined_call_operand.vmem [shape: f32[32,16], index: 1, kind: input, shape index: {}]
  %s2 = inlined_call_operand.vmem [shape: f32[1,16], index: 2, kind: input, shape index: {}]
  %s3 = inlined_call_operand.vmem [shape: f32[16,8], index: 3, kind: input, shape index: {}]
  %s4 = inlined_call_operand.vmem [shape: f32[16,8], index: 4, kind: output, shape index: {}]
  %s5 = sld [smem:[#allocation0]]
  $region49: #{tpu_custom_call.1} parent=0
    _
  %s7 = ssub.s32 1, %s5
  %s8 = scalar_select 0, %s7, %s5
  loop: start=0, step=1, limit=4
  $region2: #{tpu_custom_call.1} parent=0 // loop_pre_header
    _
  $region3: #{tpu_custom_call.1} parent=0 // loop_header
    %s10 = sphi 0, %s14
    %p11 = scmp.ge.s32.totalorder %s10, 4
    %s20 = sphi 0, %s22
    %s23 = sphi 0, %s20
    %s24 = sphi 0, %s23
    %s40 = sphi 0, %s24
    %s44 = sphi 0, %s44
    %s46 = sphi 0, %s44
    %s47 = sphi 0, %s46
    %s61 = sphi 0, %s47
    %s65 = sphi 0, %s65
    %s67 = sphi 0, %s65
    %s68 = sphi 0, %s67
    %s82 = sphi 0, %s68
    %s88 = sphi 0, %s90
    %s91 = sphi 0, %s88
    %s92 = sphi 0, %s91
    %s108 = sphi 0, %s92
    %s114 = sphi 0, %s116
    %s117 = sphi 0, %s114
    %s118 = sphi 0, %s117
    %s134 = sphi 0, %s118
  $region4: #{tpu_custom_call.1} parent=0 // loop_header_branch
    %13 = sbr.rel (%p11) target = $region8
  $region5: #{tpu_custom_call.1} parent=0 // loop_body
    %s15 = ssub.s32 %s10, 1
    %s16 = ssub.s32 %s10, 2
    %s17 = sadd.s32 %s10, 1
    %s18 = ssub.s32 %s10, %s17
    %p19 = scmp.eq.s32.totalorder %s18, 0
    %s21 = sadd.s32 %s20, 1
    %s22 = scalar_select %p19, %s20, %s21
    %p25 = pneg %p19
    %p26 = scmp.eq.s32.totalorder %s10, 1
    %p27 = por %p25, %p26
    %p28 = scmp.ne.s32.totalorder %s20, %s23
    %p29 = scmp.eq.s32.totalorder %s10, 0
    %p30 = por %p28, %p29
    %p31 = scmp.ne.s32.totalorder %s20, %s23
    %p32 = scmp.eq.s32.totalorder %s15, 1
    %p33 = por %p31, %p32
    %p34 = scmp.ne.s32.totalorder %s23, %s24
    %p35 = scmp.eq.s32.totalorder %s15, 0
    %p36 = por %p34, %p35
    %p37 = scmp.ne.s32.totalorder %s23, %s24
    %p38 = scmp.eq.s32.totalorder %s16, 1
    %p39 = por %p37, %p38
    %p41 = scmp.ne.s32.totalorder %s24, %s40
    %p42 = scmp.eq.s32.totalorder %s16, 0
    %p43 = por %p41, %p42
    %s45 = sadd.s32 %s44, 1
    %p48 = scmp.eq.s32.totalorder %s10, 1
    %p49 = scmp.ne.s32.totalorder %s44, %s46
    %p50 = scmp.eq.s32.totalorder %s10, 0
    %p51 = por %p49, %p50
    %p52 = scmp.ne.s32.totalorder %s44, %s46
    %p53 = scmp.eq.s32.totalorder %s15, 1
    %p54 = por %p52, %p53
    %p55 = scmp.ne.s32.totalorder %s46, %s47
    %p56 = scmp.eq.s32.totalorder %s15, 0
    %p57 = por %p55, %p56
    %p58 = scmp.ne.s32.totalorder %s46, %s47
    %p59 = scmp.eq.s32.totalorder %s16, 1
    %p60 = por %p58, %p59
    %p62 = scmp.ne.s32.totalorder %s47, %s61
    %p63 = scmp.eq.s32.totalorder %s16, 0
    %p64 = por %p62, %p63
    %s66 = sadd.s32 %s65, 1
    %p69 = scmp.eq.s32.totalorder %s10, 1
    %p70 = scmp.ne.s32.totalorder %s65, %s67
    %p71 = scmp.eq.s32.totalorder %s10, 0
    %p72 = por %p70, %p71
    %p73 = scmp.ne.s32.totalorder %s65, %s67
    %p74 = scmp.eq.s32.totalorder %s15, 1
    %p75 = por %p73, %p74
    %p76 = scmp.ne.s32.totalorder %s67, %s68
    %p77 = scmp.eq.s32.totalorder %s15, 0
    %p78 = por %p76, %p77
    %p79 = scmp.ne.s32.totalorder %s67, %s68
    %p80 = scmp.eq.s32.totalorder %s16, 1
    %p81 = por %p79, %p80
    %p83 = scmp.ne.s32.totalorder %s68, %s82
    %p84 = scmp.eq.s32.totalorder %s16, 0
    %p85 = por %p83, %p84
    %s86 = ssub.s32 %s10, %s17
    %p87 = scmp.eq.s32.totalorder %s86, 0
    %s89 = sadd.s32 %s88, 1
    %s90 = scalar_select %p87, %s88, %s89
    %p93 = pneg %p87
    %p94 = scmp.eq.s32.totalorder %s10, 1
    %p95 = por %p93, %p94
    %p96 = scmp.ne.s32.totalorder %s88, %s91
    %p97 = scmp.eq.s32.totalorder %s10, 0
    %p98 = por %p96, %p97
    %p99 = scmp.ne.s32.totalorder %s88, %s91
    %p100 = scmp.eq.s32.totalorder %s15, 1
    %p101 = por %p99, %p100
    %p102 = scmp.ne.s32.totalorder %s91, %s92
    %p103 = scmp.eq.s32.totalorder %s15, 0
    %p104 = por %p102, %p103
    %p105 = scmp.ne.s32.totalorder %s91, %s92
    %p106 = scmp.eq.s32.totalorder %s16, 1
    %p107 = por %p105, %p106
    %p109 = scmp.ne.s32.totalorder %s92, %s108
    %p110 = scmp.eq.s32.totalorder %s16, 0
    %p111 = por %p109, %p110
    %s112 = ssub.s32 %s10, %s17
    %p113 = scmp.eq.s32.totalorder %s112, 0
    %s115 = sadd.s32 %s114, 1
    %s116 = scalar_select %p113, %s114, %s115
    %p119 = pneg %p113
    %p120 = scmp.eq.s32.totalorder %s10, 1
    %p121 = por %p119, %p120
    %p122 = scmp.ne.s32.totalorder %s114, %s117
    %p123 = scmp.eq.s32.totalorder %s10, 0
    %p124 = por %p122, %p123
    %p125 = scmp.ne.s32.totalorder %s114, %s117
    %p126 = scmp.eq.s32.totalorder %s15, 1
    %p127 = por %p125, %p126
    %p128 = scmp.ne.s32.totalorder %s117, %s118
    %p129 = scmp.eq.s32.totalorder %s15, 0
    %p130 = por %p128, %p129
    %p131 = scmp.ne.s32.totalorder %s117, %s118
    %p132 = scmp.eq.s32.totalorder %s16, 1
    %p133 = por %p131, %p132
    %p135 = scmp.ne.s32.totalorder %s118, %s134
    %p136 = scmp.eq.s32.totalorder %s16, 0
    %p137 = por %p135, %p136
    %p138 = scmp.le.s32.totalorder 1, %s10
    %p139 = scmp.lt.s32.totalorder %s10, 3
    %p140 = pnand %p138, %p139
    %p141 = pneg %p140
    // Predicated region
    $region9: #{tpu_custom_call.1} parent=5 // pred_check
      _
    $region10: #{tpu_custom_call.1} parent=5 // pred_check_branch
      %143 = sbr.rel (%p140) target = $region12
    $region11: #{tpu_custom_call.1} parent=5 // pred_region
      %s144 = ssub.s32 %s10, 1
      // Predicated region
      $region13: #{tpu_custom_call.1} parent=11 // pred_check
        %p145 = pneg %p57
      $region14: #{tpu_custom_call.1} parent=11 // pred_check_branch
        %147 = sbr.rel (%p145) target = $region16
      $region15: #{tpu_custom_call.1} parent=11 // pred_region
        _
      $region16: #{tpu_custom_call.1} parent=11 // pred_fallthru
        _
      // Predicated region
      $region17: #{tpu_custom_call.1} parent=11 // pred_check
        %p148 = pneg %p78
      $region18: #{tpu_custom_call.1} parent=11 // pred_check_branch
        %150 = sbr.rel (%p148) target = $region20
      $region19: #{tpu_custom_call.1} parent=11 // pred_region
        _
      $region20: #{tpu_custom_call.1} parent=11 // pred_fallthru
        _
    $region12: #{tpu_custom_call.1} parent=5 // pred_fallthru
      _
    %p151 = scmp.lt.s32.totalorder %s10, 2
    // Predicated region
    $region21: #{tpu_custom_call.1} parent=5 // pred_check
      %p152 = pneg %p151
    $region22: #{tpu_custom_call.1} parent=5 // pred_check_branch
      %154 = sbr.rel (%p152) target = $region24
    $region23: #{tpu_custom_call.1} parent=5 // pred_region
      // Predicated region
      $region25: #{tpu_custom_call.1} parent=23 // pred_check
        %p155 = pneg %p30
      $region26: #{tpu_custom_call.1} parent=23 // pred_check_branch
        %157 = sbr.rel (%p155) target = $region28
      $region27: #{tpu_custom_call.1} parent=23 // pred_region
        %p158 = scmp.lt.s32.totalorder %s10, 1
        %s159 = scalar_select %p158, %s10, 1
        %s160 = smul.addr %s159, 8
        %s161 = scalar_lea.vmem %s0, %s160
      $region28: #{tpu_custom_call.1} parent=23 // pred_fallthru
        _
      // Predicated region
      $region29: #{tpu_custom_call.1} parent=23 // pred_check
        %p162 = pneg %p98
      $region30: #{tpu_custom_call.1} parent=23 // pred_check_branch
        %164 = sbr.rel (%p162) target = $region32
      $region31: #{tpu_custom_call.1} parent=23 // pred_region
        %p165 = scmp.lt.s32.totalorder %s10, 1
        %s166 = scalar_select %p165, %s10, 1
        %s167 = smul.addr %s166, 8
        %s168 = scalar_lea.vmem %s3, %s167
      $region32: #{tpu_custom_call.1} parent=23 // pred_fallthru
        _
    $region24: #{tpu_custom_call.1} parent=5 // pred_fallthru
      _
    %p169 = scmp.le.s32.totalorder 1, %s10
    %p170 = scmp.lt.s32.totalorder %s10, 3
    %p171 = pnand %p169, %p170
    %p172 = pneg %p171
    // Predicated region
    $region33: #{tpu_custom_call.1} parent=5 // pred_check
      _
    $region34: #{tpu_custom_call.1} parent=5 // pred_check_branch
      %174 = sbr.rel (%p171) target = $region36
    $region35: #{tpu_custom_call.1} parent=5 // pred_region
      %s175 = ssub.s32 %s10, 1
      %p176 = scmp.lt.s32.totalorder %s15, 1
      %s177 = scalar_select %p176, %s15, 1
      %s178 = smul.addr %s177, 8
      %s179 = scalar_lea.vmem %s0, %s178
      %p180 = pneg %p36
      %p181 = pneg %p33
      %p182 = pneg %p57
      %p183 = pneg %p54
      %p184 = pneg %p78
      %p185 = pneg %p75
      %p186 = scmp.lt.s32.totalorder %s15, 1
      %s187 = scalar_select %p186, %s15, 1
      %s188 = smul.addr %s187, 8
      %s189 = scalar_lea.vmem %s3, %s188
      %p190 = pneg %p104
      %p191 = pneg %p101
      %p192 = pneg %p130
      %p193 = pneg %p127
      %p194 = scmp.lt.s32.totalorder %s15, 1
      %s195 = scalar_select %p194, %s15, 1
      %s196 = smul.addr %s195, 8
      %s197 = scalar_lea.vmem %s4, %s196
      %p198 = scmp.lt.s32.totalorder %s15, 1
      %s199 = scalar_select %p198, %s15, 1
      %s200 = smul.addr %s199, 8
      %s201 = scalar_lea.vmem %s0, %s200
      %p202 = scmp.lt.s32.totalorder %s15, 1
      %s203 = scalar_select %p202, %s15, 1
      %s204 = smul.addr %s203, 8
      %s205 = scalar_lea.vmem %s3, %s204
      %p206 = scmp.lt.s32.totalorder %s15, 1
      %s207 = scalar_select %p206, %s15, 1
      %s208 = smul.addr %s207, 8
      %s209 = scalar_lea.vmem %s4, %s208
      %v210 = vld [vmem:[%s201] sm:$0xff]
      %v211 = vld [vmem:[%s1] sm:$0xff]
      %v212 = vld [vmem:[%s1 + $0x8] sm:$0xff]
      %v213 = vld [vmem:[%s1 + $0x10] sm:$0xff]
      %v214 = vld [vmem:[%s1 + $0x18] sm:$0xff]
      %v215 = vld [vmem:[%s2] sm:$0x1]
      %v217 = vlaneseq
      %v218 = vshrl.u32 %v217, 7
      %v219 = vsub.s32 0, %v218
      %v220 = vrot.slane %v215, %v219
      %vm222 = vcmask 261120
      %v224 = vsel %vm222, %v210, 0
      %226 = vmatprep.subr.mxu0 0.0
      %227 = vmatpush1.msra.mxu0 %v211
      %228 = vmatprep.subr.mxu0 0.0
      %229 = vmatpush1.msra.mxu0 %v212
      %230 = vmatprep.subr.mxu0 0.0
      %231 = vmatpush1.msra.mxu0 %v213
      %232 = vmatprep.subr.mxu0 0.0
      %233 = vmatpush1.msra.mxu0 %v214
      %234 = vmatprep.subr.mxu0 0.0
      %235 = vmatpush1.msra.mxu0 0.0
      %236 = vmatprep.subr.mxu0 0.0
      %237 = vmatpush1.msra.mxu0 0.0
      %238 = vmatprep.subr.mxu0 0.0
      %239 = vmatpush1.msra.mxu0 0.0
      %240 = vmatprep.subr.mxu0 0.0
      %241 = vmatpush1.msra.mxu0 0.0
      %242 = vmatprep.subr.mxu0 0.0
      %243 = vmatpush1.msra.mxu0 0.0
      %244 = vmatprep.subr.mxu0 0.0
      %245 = vmatpush1.msra.mxu0 0.0
      %246 = vmatprep.subr.mxu0 0.0
      %247 = vmatpush1.msra.mxu0 0.0
      %248 = vmatprep.subr.mxu0 0.0
      %249 = vmatpush1.msra.mxu0 0.0
      %250 = vmatprep.subr.mxu0 0.0
      %251 = vmatpush1.msra.mxu0 0.0
      %252 = vmatprep.subr.mxu0 0.0
      %253 = vmatpush1.msra.mxu0 0.0
      %254 = vmatprep.subr.mxu0 0.0
      %255 = vmatpush1.msra.mxu0 0.0
      %256 = vmatprep.subr.mxu0 0.0
      %257 = vmatpush1.msra.mxu0 0.0
      %258 = vmatprep.subr.mxu0 0.0
      %259 = vmatpush1.msra.mxu0 0.0
      %260 = vmatprep.subr.mxu0 0.0
      %261 = vmatpush1.msra.mxu0 0.0
      %262 = vmatprep.subr.mxu0 0.0
      %263 = vmatpush1.msra.mxu0 0.0
      %264 = vmatprep.subr.mxu0 0.0
      %265 = vmatpush1.msra.mxu0 0.0
      %266 = vmatprep.subr.mxu0 0.0
      %267 = vmatpush1.msra.mxu0 0.0
      %268 = vmatprep.subr.mxu0 0.0
      %269 = vmatpush1.msra.mxu0 0.0
      %270 = vmatprep.subr.mxu0 0.0
      %271 = vmatpush1.msra.mxu0 0.0
      %272 = vmatprep.subr.mxu0 0.0
      %273 = vmatpush1.msra.mxu0 0.0
      %274 = vmatprep.subr.mxu0 0.0
      %275 = vmatpush1.msra.mxu0 0.0
      %276 = vmatprep.subr.mxu0 0.0
      %277 = vmatpush1.msra.mxu0 0.0
      %278 = vmatprep.subr.mxu0 0.0
      %279 = vmatpush1.msra.mxu0 0.0
      %280 = vmatprep.subr.mxu0 0.0
      %281 = vmatpush1.msra.mxu0 0.0
      %282 = vmatprep.subr.mxu0 0.0
      %283 = vmatpush1.msra.mxu0 0.0
      %284 = vmatprep.subr.mxu0 0.0
      %285 = vmatpush1.msra.mxu0 0.0
      %286 = vmatprep.subr.mxu0 0.0
      %287 = vmatpush1.msra.mxu0 0.0
      %288 = vmatprep.subr.mxu0 0.0
      %289 = vmatpush1.msra.mxu0 0.0
      %290 = vmatprep.mubr.f32.mxu0 0.0
      %291 = vmatmul.mubr.f32.gmra.mrb[0].mxu0 %v224
      %v292 = vpop.f32.mrb[0].mxu0
      %v293 = vadd.f32 %v220, %v292
      %v294 = vpop.f32.mrb[0].mxu0
      %295 = vdwg.mxu0
      %v296 = vld [vmem:[%s205] sm:$0xff]
      %vm297 = vcmp.gt.f32.partialorder %v293, 20.0
      %v298 = vmin.f32 %v293, 20.0
      %v299 = vmul.f32 %v298, 1.442695
      %v300 = vpow.pop %v299
      %v301 = vadd.f32 %v300, 1.0
      %v302 = vlog2.pop %v301
      %v303 = vmul.f32 %v302, 0.6931472
      %v304 = vmul.f32 -0.5, %v300
      %v305 = vadd.f32 %v304, 1.0
      %v306 = vmul.f32 %v305, %v300
      %v307 = vand.u32 2147483647, %v300
      %vm308 = vcmp.lt.f32.partialorder %v307, 0.0004427343
      %v309 = vsel %vm308, %v306, %v303
      %v310 = vsel %vm297, %v293, %v309
      %312 = vrot.lane.b32.xlu0 %v310, 120
      %v313 = vpop.permute.xlu0 %312
      %v315 = vmul.f32 %v296, %v313
      %v316 = vadd.f32 %v293, %v315
      %v317 = vlaneseq
      %v318 = vand.u32 %v317, 127
      %vm319 = vcmask 64512
      %v320 = vsel %vm319, %v316, -inf
      %321 = vmax.xlane.f32.xlu0 %v320
      %v322 = vpop.xlane.xlu0 %321
      %vm323 = vcmp.eq.f32.partialorder %v316, %v322
      %v324 = vsel %vm323, %v318, 8
      %v325 = vsel %vm319, %v324, 2147483647
      %v326 = vand.u32 %v325, 65535
      %v327 = vshra.s32 %v325, 16
      %v328 = vcvt.s32.f32 %v326
      %v329 = vcvt.s32.f32 %v327
      %330 = vmin.xlane.f32.xlu0 %v329
      %v331 = vpop.xlane.xlu0 %330
      %vm332 = vcmp.eq.f32.partialorder %v329, %v331
      %v333 = vsel %vm332, %v328, inf
      %334 = vmin.xlane.f32.xlu0 %v333
      %v335 = vpop.xlane.xlu0 %334
      %v336 = vcvt.f32.s32 %v335
      %v337 = vcvt.f32.s32 %v331
      %v338 = vshll.u32 %v337, 16
      %v339 = vadd.s32 %v338, %v336
      %vm340 = vcmp.eq.s32.totalorder %v318, %v339
      %v341 = vsel %vm340, -inf, %v316
      %v342 = vsel %vm319, %v341, -inf
      %343 = vmax.xlane.f32.xlu0 %v342
      %v344 = vpop.xlane.xlu0 %343
      %vm345 = vcmp.eq.f32.partialorder %v341, %v344
      %v346 = vsel %vm345, %v318, 8
      %v347 = vsel %vm319, %v346, 2147483647
      %v348 = vand.u32 %v347, 65535
      %v349 = vshra.s32 %v347, 16
      %v350 = vcvt.s32.f32 %v348
      %v351 = vcvt.s32.f32 %v349
      %352 = vmin.xlane.f32.xlu0 %v351
      %v353 = vpop.xlane.xlu0 %352
      %vm354 = vcmp.eq.f32.partialorder %v351, %v353
      %v355 = vsel %vm354, %v350, inf
      %356 = vmin.xlane.f32.xlu0 %v355
      %v357 = vpop.xlane.xlu0 %356
      %v358 = vcvt.f32.s32 %v357
      %v359 = vcvt.f32.s32 %v353
      %v360 = vshll.u32 %v359, 16
      %v361 = vadd.s32 %v360, %v358
      %vm362 = vcmp.eq.s32.totalorder %v318, %v361
      %vm363 = vmor %vm340, %vm362
      %v364 = vsel %vm363, %v316, -inf
      %v365 = vsel %vm319, %v364, -inf
      %366 = vmax.xlane.f32.xlu0 %v365
      %v367 = vpop.xlane.xlu0 %366
      %v368 = vsub.f32 %v316, %v367
      %v369 = vmul.f32 %v368, 1.442695
      %v370 = vpow.pop %v369
      %v371 = vsel %vm363, %v370, 0.0
      %v372 = vsel %vm319, %v371, 0.0
      %373 = vadd.xlane.f32.xlu0 %v372
      %v374 = vpop.xlane.xlu0 %373
      %v375 = vrcp.pop %v374
      %v376 = vmul.f32 %v371, %v375
      %377 = vst.msk [vmem:[%s209] sm:$0xff] %vm319, %v376
      %p378 = scmp.lt.s32.totalorder %s15, 1
      %s379 = scalar_select %p378, %s15, 1
      %s380 = smul.addr %s379, 8
      %s381 = scalar_lea.vmem %s4, %s380
      // Predicated region
      $region37: #{tpu_custom_call.1} parent=35 // pred_check
        %p382 = pneg %p127
      $region38: #{tpu_custom_call.1} parent=35 // pred_check_branch
        %384 = sbr.rel (%p382) target = $region40
      $region39: #{tpu_custom_call.1} parent=35 // pred_region
        _
      $region40: #{tpu_custom_call.1} parent=35 // pred_fallthru
        _
    $region36: #{tpu_custom_call.1} parent=5 // pred_fallthru
      _
    %p385 = scmp.le.s32.totalorder 2, %s10
    // Predicated region
    $region41: #{tpu_custom_call.1} parent=5 // pred_check
      %p386 = pneg %p385
    $region42: #{tpu_custom_call.1} parent=5 // pred_check_branch
      %388 = sbr.rel (%p386) target = $region44
    $region43: #{tpu_custom_call.1} parent=5 // pred_region
      %s389 = ssub.s32 %s10, 2
      // Predicated region
      $region45: #{tpu_custom_call.1} parent=43 // pred_check
        %p390 = pneg %p133
      $region46: #{tpu_custom_call.1} parent=43 // pred_check_branch
        %392 = sbr.rel (%p390) target = $region48
      $region47: #{tpu_custom_call.1} parent=43 // pred_region
        %p393 = scmp.lt.s32.totalorder %s16, 1
        %s394 = scalar_select %p393, %s16, 1
        %s395 = smul.addr %s394, 8
        %s396 = scalar_lea.vmem %s4, %s395
      $region48: #{tpu_custom_call.1} parent=43 // pred_fallthru
        _
    $region44: #{tpu_custom_call.1} parent=5 // pred_fallthru
      _
  $region6: #{tpu_custom_call.1} parent=0 // loop_footer
    %s14 = sadd.s32 1, %s10
  $region7: #{tpu_custom_call.1} parent=0 // loop_footer_branch
    %9 = sbr.rel target = $region3
  $region8: #{tpu_custom_call.1} parent=0 // loop_exit
    _

</llo_original>
